<compile_context>
chip_gen: v5e
topology: v5e:2x2
jax: 0.10.0
libtpu: 0.0.40
codegen_flags: <defaults>
</compile_context>

<pallas_src>
import jax
import jax.numpy as jnp
from jax.experimental import pallas as pl
from jax.experimental.pallas import tpu as pltpu

_LANE = 128
_SUBLANE = 8

# Tensors below this byte-size bypass Pallas entirely: a custom call has fixed
# launch overhead and blocks XLA fusion, which dominates for tiny tensors.
_MIN_PALLAS_BYTES = 256 * 1024

# Target ~2 MiB (f32) per tile: big enough to amortize the ~0.35 us/step grid
# overhead and reach ~85% of HBM roofline, while 4 x tile (in + out, double-
# buffered) stays under the 16 MiB default scoped-VMEM budget of v5e and well
# under v7x's 64 MiB physical VMEM.
_TARGET_TILE_ELEMS = 512 * 1024  # elements (= 2 MiB at f32)


def _sigmoid_kernel(x_ref, o_ref):
    # Compute in f32 (exp lands on the EUP slot, which is never the binding
    # unit for a mem-bound kernel); cast back on store for sub-32-bit dtypes.
    x = x_ref[...].astype(jnp.float32)
    o_ref[...] = (1.0 / (1.0 + jnp.exp(-x))).astype(o_ref.dtype)


def _sigmoid_pallas_2d(x2d: jax.Array) -> jax.Array:
    rows, cols = x2d.shape
    block_rows = max(
        _SUBLANE,
        min(rows, (_TARGET_TILE_ELEMS // cols) // _SUBLANE * _SUBLANE),
    )
    # cdiv grid: Pallas masks the partial edge block, so no divisibility loop
    # that could collapse the tile size on awkward row counts.
    grid = (pl.cdiv(rows, block_rows),)
    return pl.pallas_call(
        _sigmoid_kernel,
        out_shape=jax.ShapeDtypeStruct((rows, cols), x2d.dtype),
        grid=grid,
        in_specs=[pl.BlockSpec((block_rows, cols), lambda i: (i, 0))],
        out_specs=pl.BlockSpec((block_rows, cols), lambda i: (i, 0)),
        compiler_params=pltpu.CompilerParams(
            # Independent blocks -> lets v7x shard the grid over both TCs.
            dimension_semantics=("parallel",),
        ),
    )(x2d)


def net_forward(x: jax.Array, *, use_pallas: bool | None = None) -> jax.Array:
    """Pallas equivalent of Net.forward: elementwise sigmoid, any shape/dtype."""
    n = x.size
    if use_pallas is None:
        use_pallas = n * x.dtype.itemsize >= _MIN_PALLAS_BYTES
    if not use_pallas:
        # Small-input bypass: keep XLA fusion, skip custom-call overhead.
        return jax.nn.sigmoid(x)

    # Fast path: pick the widest lane-dense slab whose (8, cols) tile divides n
    # exactly -> pure reshape, no pad in, no slice out, no extra HBM traffic.
    for cols in (8 * _LANE, 4 * _LANE, 2 * _LANE, _LANE):
        if n % (_SUBLANE * cols) == 0:
            x2d = x.reshape(n // cols, cols)
            return _sigmoid_pallas_2d(x2d).reshape(x.shape)

    # Ragged total size (rare for NN activations): let XLA handle it instead of
    # materializing a padded copy + slice, which would ~3x the HBM traffic.
    # TODO(synk): handle the ragged tail inside the kernel with a masked store.
    return jax.nn.sigmoid(x)


if __name__ == "__main__":
    key = jax.random.PRNGKey(0)
    k1, k2, _ = jax.random.split(key, 3)

    # Small NCHW demo input consistent with a conv-style module.
    x = jax.random.normal(k1, (2, 4, 16, 16), dtype=jnp.float32)

    # Force the Pallas path so the kernel is compiled & exercised even though
    # this demo tensor is below the auto-bypass threshold.
    y = net_forward(x, use_pallas=True)
    jax.block_until_ready(y)
    y_ref = jax.nn.sigmoid(x)
    assert y.shape == x.shape and y.dtype == x.dtype
    assert jnp.max(jnp.abs(y - y_ref)) < 1e-5

    # bf16 path: f32 compute inside the kernel, cast back on store.
    xb = jax.random.normal(k2, (2, 4, 16, 128), dtype=jnp.bfloat16)
    yb = net_forward(xb, use_pallas=True)
    jax.block_until_ready(yb)
    assert yb.shape == xb.shape and yb.dtype == jnp.bfloat16
    err_b = jnp.max(jnp.abs(yb.astype(jnp.float32)
                            - jax.nn.sigmoid(xb.astype(jnp.float32))))
    assert err_b < 1e-2

    # Auto path (tiny input -> XLA bypass) still matches the reference.
    y_auto = net_forward(x)
    jax.block_until_ready(y_auto)
    assert jnp.max(jnp.abs(y_auto - y_ref)) < 1e-5

    print("KERNEL_OK")
</pallas_src>

<mosaic_0001>
module attributes {stable_mosaic.version = 11 : i64} {
  func.func @_sigmoid_kernel(%arg0: i32, %arg1: memref<8x256xf32, #tpu.memory_space<vmem>>, %arg2: memref<8x256xf32, #tpu.memory_space<vmem>>) attributes {dimension_semantics = [#tpu.dimension_semantics<parallel>], iteration_bounds = array<i64: 1>, scalar_prefetch = 0 : i64, scratch_operands = 0 : i64, tpu.core_type = #tpu.core_type<tc>, window_params = [{transform_indices = @transform_0, window_bounds = array<i64: 8, 256>}, {transform_indices = @transform_1, window_bounds = array<i64: 8, 256>}]} {
    %c0 = arith.constant 0 : index
    %c0_0 = arith.constant 0 : index
    %0 = vector.load %arg1[%c0, %c0_0] : memref<8x256xf32, #tpu.memory_space<vmem>>, vector<8x256xf32>
    %cst = arith.constant 0.000000e+00 : f32
    %1 = vector.broadcast %cst : f32 to vector<8x256xf32>
    %2 = arith.subf %1, %0 : vector<8x256xf32>
    %3 = math.exp %2 : vector<8x256xf32>
    %cst_1 = arith.constant 1.000000e+00 : f32
    %4 = vector.broadcast %cst_1 : f32 to vector<8x256xf32>
    %5 = arith.addf %4, %3 : vector<8x256xf32>
    %cst_2 = arith.constant 1.000000e+00 : f32
    %6 = vector.broadcast %cst_2 : f32 to vector<8x256xf32>
    %7 = arith.divf %6, %5 : vector<8x256xf32>
    %c0_3 = arith.constant 0 : index
    %c0_4 = arith.constant 0 : index
    %8 = vector.load %arg2[%c0_3, %c0_4] : memref<8x256xf32, #tpu.memory_space<vmem>>, vector<8x256xf32>
    tpu.vector_store %arg2[%c0_3, %c0_4], %7 {strides = array<i32>} : memref<8x256xf32, #tpu.memory_space<vmem>>, vector<8x256xf32>,
    return
  }
  func.func @transform_0(%arg0: i32) -> (i32, i32) {
    %c0_i32 = arith.constant 0 : i32
    %c0_i32_0 = arith.constant 0 : i32
    return %arg0, %c0_i32 : i32, i32
  }
  func.func @transform_1(%arg0: i32) -> (i32, i32) {
    %c0_i32 = arith.constant 0 : i32
    %c0_i32_0 = arith.constant 0 : i32
    return %arg0, %c0_i32 : i32, i32
  }
}

</mosaic_0001>

<llo_original>
// kernel: tpu_custom_call.1
$region0: #{tpu_custom_call.1}
  #allocation0 [shape = 'u32[]', space=smem, size = 0x4, offset = 0x4, fixed_abs, tag = 'smem constant byte address 0x4 - core index']
  #allocation1 [shape = 'u32[72,128]{1,0:T(1,128)}', space=vmem, size = 0x9000, scoped, tag = 'internal scratch']
  %s0 = inlined_call_operand.hbm [shape: f32[8,256], index: 0, kind: input, shape index: {}]
  %s1 = inlined_call_operand.hbm [shape: f32[8,256], index: 1, kind: output, shape index: {}]
  %s2 = sld [smem:[#allocation0]]
  $region18: #{tpu_custom_call.1} parent=0
    _
  %s4 = ssub.s32 1, %s2
  %s5 = scalar_select 0, %s4, %s2
  $region1: #{tpu_custom_call.1} parent=0
    #allocation2 [shape = 'u8[8192]{0}', space=vmem, size = 0x2000, scoped, tag = 'input window, operand 0, single buffered']
    #allocation3 [shape = 's32[1]{0}', space=sflag, size = 0x4, scoped, tag = 'scoped memory for tpu_custom_call.1']
    #allocation4 [shape = 's32[1]{0}', space=sflag, size = 0x4, scoped, tag = 'scoped memory for tpu_custom_call.1']
    #allocation5 [shape = 'u8[8192]{0}', space=vmem, size = 0x2000, scoped, tag = 'output window, operand 0, single buffered']
    %6 = vsyncpa [#allocation3], 0
    %7 = vsyncpa [#allocation4], 0
    // Predicated region
    $region2: #{tpu_custom_call.1} parent=1 // pred_check
      _
    $region3: #{tpu_custom_call.1} parent=1 // pred_check_branch
      %9 = sbr.rel (0) target = $region5
    $region4: #{tpu_custom_call.1} parent=1 // pred_region
      %11 = vsyncadd [#allocation3], 0
      %s13 = sshll.u32 %s0, 4
      %s14 = int_to_ptr.hbm [resolvable:$true] %s13
      %s15 = sshll.u32 [#allocation2], 4
      %s16 = int_to_ptr.vmem [resolvable:$true] %s15
      %18 = dma.hbm_to_vmem [thread:$0]  %s14, 256, %s16, [#allocation3]
    $region5: #{tpu_custom_call.1} parent=1 // pred_fallthru
      _
    // Predicated region
    $region6: #{tpu_custom_call.1} parent=1 // pred_check
      _
    $region7: #{tpu_custom_call.1} parent=1 // pred_check_branch
      %20 = sbr.rel (0) target = $region9
    $region8: #{tpu_custom_call.1} parent=1 // pred_region
      %22 = dma.done [#allocation3], 256
    $region9: #{tpu_custom_call.1} parent=1 // pred_fallthru
      _
    %v23 = vld [vmem:[#allocation2] sm:$0xff]
    %v24 = vld [vmem:[#allocation2 + $0x8] sm:$0xff]
    %v25 = vsub.f32 0.0, %v23
    %v26 = vsub.f32 0.0, %v24
    %v27 = vmul.f32 %v25, 1.442695
    %v28 = vpow.pop %v27
    %v29 = vmul.f32 %v26, 1.442695
    %v30 = vpow.pop %v29
    %v31 = vadd.f32 %v28, 1.0
    %v32 = vadd.f32 %v30, 1.0
    %v33 = vrcp.pop %v31
    %v34 = vmul.f32 %v31, %v33
    %v35 = vsub.f32 1.0, %v34
    %v36 = vmul.f32 %v33, %v35
    %v37 = vadd.f32 %v33, %v36
    %vm38 = vweird.f32 %v31
    %vm39 = vweird.f32 %v33
    %vm40 = vmor %vm38, %vm39
    %v41 = vsel %vm40, %v33, %v37
    %v42 = vand.u32 2147483647, %v31
    %vm43 = vcmp.eq.f32.partialorder %v42, 8.507059e+37
    %v44 = vand.u32 %v31, 2147483648
    %v45 = vor.u32 1.1754944e-38, %v44
    %v46 = vsel %vm43, %v45, %v41
    %v47 = vmul.f32 1.0, %v46
    %v48 = vrcp.pop %v32
    %v49 = vmul.f32 %v32, %v48
    %v50 = vsub.f32 1.0, %v49
    %v51 = vmul.f32 %v48, %v50
    %v52 = vadd.f32 %v48, %v51
    %vm53 = vweird.f32 %v32
    %vm54 = vweird.f32 %v48
    %vm55 = vmor %vm53, %vm54
    %v56 = vsel %vm55, %v48, %v52
    %v57 = vand.u32 2147483647, %v32
    %vm58 = vcmp.eq.f32.partialorder %v57, 8.507059e+37
    %v59 = vand.u32 %v32, 2147483648
    %v60 = vor.u32 1.1754944e-38, %v59
    %v61 = vsel %vm58, %v60, %v56
    %v62 = vmul.f32 1.0, %v61
    %63 = vst [vmem:[#allocation5] sm:$0xff] %v47
    %64 = vst [vmem:[#allocation5 + $0x8] sm:$0xff] %v62
    // Predicated region
    $region10: #{tpu_custom_call.1} parent=1 // pred_check
      _
    $region11: #{tpu_custom_call.1} parent=1 // pred_check_branch
      %66 = sbr.rel (0) target = $region13
    $region12: #{tpu_custom_call.1} parent=1 // pred_region
      %68 = vsyncadd [#allocation4], 0
      %s70 = sshll.u32 [#allocation5], 4
      %s71 = int_to_ptr.vmem [resolvable:$true] %s70
      %s72 = sshll.u32 %s1, 4
      %s73 = int_to_ptr.hbm [resolvable:$true] %s72
      %75 = dma.vmem_to_hbm [thread:$0]  %s71, 256, %s73, [#allocation4]
    $region13: #{tpu_custom_call.1} parent=1 // pred_fallthru
      _
    // Predicated region
    $region14: #{tpu_custom_call.1} parent=1 // pred_check
      _
    $region15: #{tpu_custom_call.1} parent=1 // pred_check_branch
      %77 = sbr.rel (0) target = $region17
    $region16: #{tpu_custom_call.1} parent=1 // pred_region
      %79 = dma.done [#allocation4], 256
    $region17: #{tpu_custom_call.1} parent=1 // pred_fallthru
      _
    %80 = vsyncpa [#allocation3], 1
    %81 = vsyncpa [#allocation4], 1

</llo_original>
